<compile_context>
chip_gen: v7x
topology: tpu7x:2x2x1
jax: 0.10.0
libtpu: 0.0.40
codegen_flags: <defaults>
</compile_context>

<pallas_src>
import math

import jax
import jax.numpy as jnp
from jax.experimental import pallas as pl
from jax.experimental.pallas import tpu as pltpu

LN_EPS = 1e-5


def _mln_kernel(x_ref, c_ref, wr_ref, br_ref, wgb_ref, bgb_ref, o_ref):
    f_dim = x_ref.shape[-1]

    # ---- LayerNorm over lanes (f32, no affine), single-pass moments ----
    x = x_ref[...].astype(jnp.float32)
    mean = jnp.mean(x, axis=-1, keepdims=True)
    mean_sq = jnp.mean(x * x, axis=-1, keepdims=True)
    var = jnp.maximum(mean_sq - mean * mean, 0.0)
    x_ln = (x - mean) * jax.lax.rsqrt(var + LN_EPS)

    # ---- reduce: Linear(c_dim -> f_dim) + ReLU (bf16 MXU inputs, f32 acc) ----
    h = jnp.dot(c_ref[...].astype(jnp.bfloat16), wr_ref[...],
                preferred_element_type=jnp.float32) + br_ref[...]
    h = jnp.maximum(h, 0.0)

    # ---- fused gamma|beta head: one lane-dense f_dim -> 2*f_dim matmul ----
    gb = jnp.dot(h.astype(jnp.bfloat16), wgb_ref[...],
                 preferred_element_type=jnp.float32) + bgb_ref[...]
    gamma = gb[:, :f_dim]
    beta = gb[:, f_dim:]

    o_ref[...] = (gamma * x_ln + beta).astype(o_ref.dtype)


def mln_forward(x, c, params, *, tile_rows=512):
    """x: (..., f_dim), c: (..., c_dim) with identical leading dims."""
    f_dim = x.shape[-1]
    c_dim = c.shape[-1]
    lead = x.shape[:-1]
    assert c.shape[:-1] == lead, "x and c must share leading dims"

    n_rows = math.prod(lead) if lead else 1
    x2 = x.reshape(n_rows, f_dim)
    c2 = c.reshape(n_rows, c_dim)

    # Row tile: sublane-aligned (multiple of 8), capped near the row count.
    # The grid uses cdiv, so non-divisible row counts rely on Pallas's masked
    # trailing block instead of an explicit pad/slice round-trip through HBM.
    tr = max(8, min(tile_rows, n_rows))
    tr = ((tr + 7) // 8) * 8
    grid = (pl.cdiv(n_rows, tr),)

    # Pack weights: pre-transposed (in, out); fuse gamma|beta; bf16 for the MXU.
    wr = params["wr"].astype(jnp.bfloat16)
    wgb = jnp.concatenate([params["wg"], params["wb"]], axis=1).astype(jnp.bfloat16)
    br = params["br"].astype(jnp.float32)
    bgb = jnp.concatenate([params["bg"], params["bb"]], axis=1).astype(jnp.float32)

    const_spec = lambda shape: pl.BlockSpec(shape, lambda i: (0, 0))

    out = pl.pallas_call(
        _mln_kernel,
        out_shape=jax.ShapeDtypeStruct((n_rows, f_dim), x.dtype),
        grid_spec=pltpu.PrefetchScalarGridSpec(
            num_scalar_prefetch=0,
            grid=grid,
            in_specs=[
                pl.BlockSpec((tr, f_dim), lambda i: (i, 0)),   # x rows
                pl.BlockSpec((tr, c_dim), lambda i: (i, 0)),   # c rows
                const_spec((c_dim, f_dim)),                    # Wr  (in, out) bf16
                const_spec((1, f_dim)),                        # br  f32
                const_spec((f_dim, 2 * f_dim)),                # Wg|Wb fused, bf16
                const_spec((1, 2 * f_dim)),                    # bg|bb fused, f32
            ],
            out_specs=pl.BlockSpec((tr, f_dim), lambda i: (i, 0)),
        ),
        compiler_params=pltpu.CompilerParams(
            dimension_semantics=("parallel",),
        ),
    )(x2, c2, wr, br, wgb, bgb)

    return out.reshape(*lead, f_dim)


def init_mln_params(key, c_dim, f_dim, dtype=jnp.float32):
    """Deterministic synthetic init (PyTorch init_weight zeroes gamma/beta
    weights; here small random values so the matmul path is exercised)."""
    k1, k2, k3 = jax.random.split(key, 3)
    # Weights stored pre-transposed: (in_features, out_features).
    wr = (jax.random.normal(k1, (c_dim, f_dim)) / jnp.sqrt(c_dim)).astype(dtype)
    wg = (jax.random.normal(k2, (f_dim, f_dim)) / jnp.sqrt(f_dim)).astype(dtype)
    wb = (jax.random.normal(k3, (f_dim, f_dim)) / jnp.sqrt(f_dim)).astype(dtype)
    br = jnp.zeros((1, f_dim), dtype)
    bg = jnp.ones((1, f_dim), dtype)    # init_weight(): gamma bias = 1
    bb = jnp.zeros((1, f_dim), dtype)   # init_weight(): beta bias = 0
    return dict(wr=wr, br=br, wg=wg, bg=bg, wb=wb, bb=bb)


def mln_reference_f32(x, c, params):
    """Full-f32 PyTorch-equivalent reference."""
    x32 = x.astype(jnp.float32)
    mean = jnp.mean(x32, axis=-1, keepdims=True)
    var = jnp.mean((x32 - mean) ** 2, axis=-1, keepdims=True)
    x_ln = (x32 - mean) * jax.lax.rsqrt(var + LN_EPS)
    h = jnp.maximum(c.astype(jnp.float32) @ params["wr"] + params["br"], 0.0)
    gamma = h @ params["wg"] + params["bg"]
    beta = h @ params["wb"] + params["bb"]
    return (gamma * x_ln + beta).astype(x.dtype)


def mln_reference_kernel_precision(x, c, params):
    """Mirrors the kernel's bf16-matmul / f32-accumulate precision choices."""
    f_dim = x.shape[-1]
    x32 = x.astype(jnp.float32)
    mean = jnp.mean(x32, axis=-1, keepdims=True)
    mean_sq = jnp.mean(x32 * x32, axis=-1, keepdims=True)
    var = jnp.maximum(mean_sq - mean * mean, 0.0)
    x_ln = (x32 - mean) * jax.lax.rsqrt(var + LN_EPS)
    wr = params["wr"].astype(jnp.bfloat16)
    wgb = jnp.concatenate([params["wg"], params["wb"]], axis=1).astype(jnp.bfloat16)
    bgb = jnp.concatenate([params["bg"], params["bb"]], axis=1).astype(jnp.float32)
    h = jnp.maximum(
        jnp.dot(c.astype(jnp.bfloat16), wr, preferred_element_type=jnp.float32)
        + params["br"], 0.0)
    gb = jnp.dot(h.astype(jnp.bfloat16), wgb,
                 preferred_element_type=jnp.float32) + bgb
    return (gb[..., :f_dim] * x_ln + gb[..., f_dim:]).astype(x.dtype)


if __name__ == "__main__":
    # f_dim=256 matches the module default (lane-dense; fused head N=512).
    # Row count (200) deliberately not a multiple of the tile so the masked
    # trailing-block path is exercised; tile_rows=64 gives a 4-step grid.
    B, S = 2, 100
    c_dim, f_dim = 32, 256

    key = jax.random.PRNGKey(0)
    kx, kc, kp = jax.random.split(key, 3)
    x = jax.random.normal(kx, (B, S, f_dim), jnp.float32)
    c = jax.random.normal(kc, (B, S, c_dim), jnp.float32)
    params = init_mln_params(kp, c_dim, f_dim)

    out = mln_forward(x, c, params, tile_rows=64)
    out = jax.block_until_ready(out)
    assert out.shape == (B, S, f_dim)

    # Tight check vs a reference with the same (bf16 matmul, f32 acc) precision.
    ref_kp = mln_reference_kernel_precision(x, c, params)
    assert jnp.allclose(out, ref_kp, atol=5e-3, rtol=5e-3), \
        "mismatch vs kernel-precision reference"

    # Loose check vs the full-f32 PyTorch-equivalent reference.
    ref_f32 = mln_reference_f32(x, c, params)
    assert jnp.allclose(out, ref_f32, atol=1e-1, rtol=1e-1), \
        "mismatch vs f32 reference"

    print("KERNEL_OK")
</pallas_src>

<mosaic_0001>
module attributes {stable_mosaic.version = 11 : i64} {
  func.func @_mln_kernel(%arg0: i32, %arg1: memref<64x256xf32, #tpu.memory_space<vmem>>, %arg2: memref<64x32xf32, #tpu.memory_space<vmem>>, %arg3: memref<32x256xbf16, #tpu.memory_space<vmem>>, %arg4: memref<1x256xf32, #tpu.memory_space<vmem>>, %arg5: memref<256x512xbf16, #tpu.memory_space<vmem>>, %arg6: memref<1x512xf32, #tpu.memory_space<vmem>>, %arg7: memref<64x256xf32, #tpu.memory_space<vmem>>) attributes {dimension_semantics = [#tpu.dimension_semantics<parallel>], iteration_bounds = array<i64: 4>, scalar_prefetch = 0 : i64, scratch_operands = 0 : i64, tpu.core_type = #tpu.core_type<tc>, window_params = [{transform_indices = @transform_0, window_bounds = array<i64: 64, 256>}, {transform_indices = @transform_1, window_bounds = array<i64: 64, 32>}, {pipeline_mode = #tpu.pipeline_mode<synchronous>, transform_indices = @transform_2, window_bounds = array<i64: 32, 256>}, {pipeline_mode = #tpu.pipeline_mode<synchronous>, transform_indices = @transform_3, window_bounds = array<i64: 1, 256>}, {pipeline_mode = #tpu.pipeline_mode<synchronous>, transform_indices = @transform_4, window_bounds = array<i64: 256, 512>}, {pipeline_mode = #tpu.pipeline_mode<synchronous>, transform_indices = @transform_5, window_bounds = array<i64: 1, 512>}, {transform_indices = @transform_6, window_bounds = array<i64: 64, 256>}]} {
    %c0 = arith.constant 0 : index
    %c0_0 = arith.constant 0 : index
    %0 = vector.load %arg1[%c0, %c0_0] : memref<64x256xf32, #tpu.memory_space<vmem>>, vector<64x256xf32>
    %cst = arith.constant dense<0.000000e+00> : vector<64xf32>
    %1 = vector.multi_reduction <add>, %0, %cst [1] : vector<64x256xf32> to vector<64xf32>
    %2 = vector.shape_cast %1 : vector<64xf32> to vector<64x1xf32>
    %cst_1 = arith.constant 2.560000e+02 : f32
    %3 = vector.broadcast %cst_1 : f32 to vector<64x1xf32>
    %4 = arith.divf %2, %3 : vector<64x1xf32>
    %5 = arith.mulf %0, %0 : vector<64x256xf32>
    %cst_2 = arith.constant dense<0.000000e+00> : vector<64xf32>
    %6 = vector.multi_reduction <add>, %5, %cst_2 [1] : vector<64x256xf32> to vector<64xf32>
    %7 = vector.shape_cast %6 : vector<64xf32> to vector<64x1xf32>
    %cst_3 = arith.constant 2.560000e+02 : f32
    %8 = vector.broadcast %cst_3 : f32 to vector<64x1xf32>
    %9 = arith.divf %7, %8 : vector<64x1xf32>
    %10 = arith.mulf %4, %4 : vector<64x1xf32>
    %11 = arith.subf %9, %10 : vector<64x1xf32>
    %cst_4 = arith.constant 0.000000e+00 : f32
    %12 = vector.broadcast %cst_4 : f32 to vector<64x1xf32>
    %13 = arith.maximumf %11, %12 : vector<64x1xf32>
    %14 = vector.broadcast %4 : vector<64x1xf32> to vector<64x256xf32>
    %15 = arith.subf %0, %14 : vector<64x256xf32>
    %cst_5 = arith.constant 9.99999974E-6 : f32
    %16 = vector.broadcast %cst_5 : f32 to vector<64x1xf32>
    %17 = arith.addf %13, %16 : vector<64x1xf32>
    %18 = math.rsqrt %17 : vector<64x1xf32>
    %19 = vector.broadcast %18 : vector<64x1xf32> to vector<64x256xf32>
    %20 = arith.mulf %15, %19 : vector<64x256xf32>
    %c0_6 = arith.constant 0 : index
    %c0_7 = arith.constant 0 : index
    %21 = vector.load %arg2[%c0_6, %c0_7] : memref<64x32xf32, #tpu.memory_space<vmem>>, vector<64x32xf32>
    %22 = arith.truncf %21 : vector<64x32xf32> to vector<64x32xbf16>
    %c0_8 = arith.constant 0 : index
    %c0_9 = arith.constant 0 : index
    %23 = vector.load %arg3[%c0_8, %c0_9] : memref<32x256xbf16, #tpu.memory_space<vmem>>, vector<32x256xbf16>
    %cst_10 = arith.constant dense<0.000000e+00> : vector<64x256xf32>
    %24 = tpu.matmul %22, %23, %cst_10 {dimension_numbers = #tpu.dot_dimension_numbers<[1], [0], [0], [1], [0, 0, 1, 1], [], []>} : vector<64x32xbf16>, vector<32x256xbf16>, vector<64x256xf32> -> vector<64x256xf32>
    %c0_11 = arith.constant 0 : index
    %c0_12 = arith.constant 0 : index
    %25 = vector.load %arg4[%c0_11, %c0_12] : memref<1x256xf32, #tpu.memory_space<vmem>>, vector<1x256xf32>
    %26 = vector.broadcast %25 : vector<1x256xf32> to vector<64x256xf32>
    %27 = arith.addf %24, %26 : vector<64x256xf32>
    %cst_13 = arith.constant 0.000000e+00 : f32
    %28 = vector.broadcast %cst_13 : f32 to vector<64x256xf32>
    %29 = arith.maximumf %27, %28 : vector<64x256xf32>
    %30 = arith.truncf %29 : vector<64x256xf32> to vector<64x256xbf16>
    %c0_14 = arith.constant 0 : index
    %c0_15 = arith.constant 0 : index
    %31 = vector.load %arg5[%c0_14, %c0_15] : memref<256x512xbf16, #tpu.memory_space<vmem>>, vector<256x512xbf16>
    %cst_16 = arith.constant dense<0.000000e+00> : vector<64x512xf32>
    %32 = tpu.matmul %30, %31, %cst_16 {dimension_numbers = #tpu.dot_dimension_numbers<[1], [0], [0], [1], [0, 0, 1, 1], [], []>} : vector<64x256xbf16>, vector<256x512xbf16>, vector<64x512xf32> -> vector<64x512xf32>
    %c0_17 = arith.constant 0 : index
    %c0_18 = arith.constant 0 : index
    %33 = vector.load %arg6[%c0_17, %c0_18] : memref<1x512xf32, #tpu.memory_space<vmem>>, vector<1x512xf32>
    %34 = vector.broadcast %33 : vector<1x512xf32> to vector<64x512xf32>
    %35 = arith.addf %32, %34 : vector<64x512xf32>
    %36 = vector.extract_strided_slice %35 {offsets = [0, 0], sizes = [64, 256], strides = [1, 1]} : vector<64x512xf32> to vector<64x256xf32>
    %37 = vector.extract_strided_slice %35 {offsets = [0, 256], sizes = [64, 256], strides = [1, 1]} : vector<64x512xf32> to vector<64x256xf32>
    %38 = arith.mulf %36, %20 : vector<64x256xf32>
    %39 = arith.addf %38, %37 : vector<64x256xf32>
    %c0_19 = arith.constant 0 : index
    %c0_20 = arith.constant 0 : index
    %40 = vector.load %arg7[%c0_19, %c0_20] : memref<64x256xf32, #tpu.memory_space<vmem>>, vector<64x256xf32>
    tpu.vector_store %arg7[%c0_19, %c0_20], %39 {strides = array<i32>} : memref<64x256xf32, #tpu.memory_space<vmem>>, vector<64x256xf32>,
    return
  }
  func.func @transform_0(%arg0: i32) -> (i32, i32) {
    %c0_i32 = arith.constant 0 : i32
    %c0_i32_0 = arith.constant 0 : i32
    return %arg0, %c0_i32 : i32, i32
  }
  func.func @transform_1(%arg0: i32) -> (i32, i32) {
    %c0_i32 = arith.constant 0 : i32
    %c0_i32_0 = arith.constant 0 : i32
    return %arg0, %c0_i32 : i32, i32
  }
  func.func @transform_2(%arg0: i32) -> (i32, i32) {
    %c0_i32 = arith.constant 0 : i32
    %c0_i32_0 = arith.constant 0 : i32
    %c0_i32_1 = arith.constant 0 : i32
    return %c0_i32, %c0_i32_0 : i32, i32
  }
  func.func @transform_3(%arg0: i32) -> (i32, i32) {
    %c0_i32 = arith.constant 0 : i32
    %c0_i32_0 = arith.constant 0 : i32
    %c0_i32_1 = arith.constant 0 : i32
    return %c0_i32, %c0_i32_0 : i32, i32
  }
  func.func @transform_4(%arg0: i32) -> (i32, i32) {
    %c0_i32 = arith.constant 0 : i32
    %c0_i32_0 = arith.constant 0 : i32
    %c0_i32_1 = arith.constant 0 : i32
    return %c0_i32, %c0_i32_0 : i32, i32
  }
  func.func @transform_5(%arg0: i32) -> (i32, i32) {
    %c0_i32 = arith.constant 0 : i32
    %c0_i32_0 = arith.constant 0 : i32
    %c0_i32_1 = arith.constant 0 : i32
    return %c0_i32, %c0_i32_0 : i32, i32
  }
  func.func @transform_6(%arg0: i32) -> (i32, i32) {
    %c0_i32 = arith.constant 0 : i32
    %c0_i32_0 = arith.constant 0 : i32
    return %arg0, %c0_i32 : i32, i32
  }
}

</mosaic_0001>

<llo_original>
// kernel: tpu_custom_call.1
$region0: #{tpu_custom_call.1}
  #allocation0 [shape = 'u32[]', space=smem, size = 0x4, offset = 0x4, fixed_abs, tag = 'smem constant byte address 0x4 - core index']
  #allocation1 [shape = 'u32[144,128]{1,0:T(1,128)}', space=vmem, size = 0x12000, scoped, tag = 'internal scratch']
  %s0 = inlined_call_operand.hbm [shape: f32[200,256], index: 0, kind: input, shape index: {}]
  %s1 = inlined_call_operand.vmem [shape: f32[200,32], index: 1, kind: input, shape index: {}]
  %s2 = inlined_call_operand.vmem [shape: bf16[32,256], index: 2, kind: input, shape index: {}]
  %s3 = inlined_call_operand.vmem [shape: f32[1,256], index: 3, kind: input, shape index: {}]
  %s4 = inlined_call_operand.hbm [shape: bf16[256,512], index: 4, kind: input, shape index: {}]
  %s5 = inlined_call_operand.vmem [shape: f32[1,512], index: 5, kind: input, shape index: {}]
  %s6 = inlined_call_operand.hbm [shape: f32[200,256], index: 6, kind: output, shape index: {}]
  %s7 = sld [smem:[#allocation0]]
  $region65: #{tpu_custom_call.1} parent=0
    _
  %s9 = ssub.s32 1, %s7
  %s10 = scalar_select 0, %s9, %s7
  $region1: #{tpu_custom_call.1} parent=0
    #allocation2 [shape = 'u8[131072]{0}', space=vmem, size = 0x20000, scoped, tag = 'input window, operand 0']
    #allocation3 [shape = 's32[2]{0}', space=sflag, size = 0x8, scoped, tag = 'scoped memory for tpu_custom_call.1']
    #allocation4 [shape = 's32[2]{0}', space=sflag, size = 0x8, scoped, tag = 'scoped memory for tpu_custom_call.1']
    #allocation5 [shape = 'u8[262144]{0}', space=vmem, size = 0x40000, scoped, tag = 'input window, operand 4, single buffered']
    #allocation6 [shape = 's32[1]{0}', space=sflag, size = 0x4, scoped, tag = 'scoped memory for tpu_custom_call.1']
    #allocation7 [shape = 'u8[131072]{0}', space=vmem, size = 0x20000, scoped, tag = 'output window, operand 0']
    %11 = vsyncpa [#allocation3], 0
    %s12 = scalar_lea.sflag [#allocation3], 1
    %13 = vsyncpa %s12, 0
    %14 = vsyncpa [#allocation6], 0
    %15 = vsyncpa [#allocation4], 0
    %s16 = scalar_lea.sflag [#allocation4], 1
    %17 = vsyncpa %s16, 0
    loop: start=0, step=1, limit=6
    $region2: #{tpu_custom_call.1} parent=1 // loop_pre_header
      _
    $region3: #{tpu_custom_call.1} parent=1 // loop_header
      %s19 = sphi 0, %s23
      %p20 = scmp.ge.s32.totalorder %s19, 6
      %s29 = sphi 0, %s31
      %s32 = sphi 0, %s29
      %s33 = sphi 0, %s32
      %s49 = sphi 0, %s33
      %s55 = sphi 0, %s57
      %s58 = sphi 0, %s55
      %s59 = sphi 0, %s58
      %s75 = sphi 0, %s59
      %s79 = sphi 0, %s79
      %s81 = sphi 0, %s79
      %s82 = sphi 0, %s81
      %s96 = sphi 0, %s82
      %s100 = sphi 0, %s100
      %s102 = sphi 0, %s100
      %s103 = sphi 0, %s102
      %s117 = sphi 0, %s103
      %s121 = sphi 0, %s121
      %s123 = sphi 0, %s121
      %s124 = sphi 0, %s123
      %s138 = sphi 0, %s124
      %s142 = sphi 0, %s142
      %s144 = sphi 0, %s142
      %s145 = sphi 0, %s144
      %s159 = sphi 0, %s145
      %s165 = sphi 0, %s167
      %s168 = sphi 0, %s165
      %s169 = sphi 0, %s168
      %s185 = sphi 0, %s169
    $region4: #{tpu_custom_call.1} parent=1 // loop_header_branch
      %22 = sbr.rel (%p20) target = $region8
    $region5: #{tpu_custom_call.1} parent=1 // loop_body
      %s24 = ssub.s32 %s19, 1
      %s25 = ssub.s32 %s19, 2
      %s26 = sadd.s32 %s19, 1
      %s27 = ssub.s32 %s19, %s26
      %p28 = scmp.eq.s32.totalorder %s27, 0
      %s30 = sadd.s32 %s29, 1
      %s31 = scalar_select %p28, %s29, %s30
      %p34 = pneg %p28
      %p35 = scmp.eq.s32.totalorder %s19, 3
      %p36 = por %p34, %p35
      %p37 = scmp.ne.s32.totalorder %s29, %s32
      %p38 = scmp.eq.s32.totalorder %s19, 0
      %p39 = por %p37, %p38
      %p40 = scmp.ne.s32.totalorder %s29, %s32
      %p41 = scmp.eq.s32.totalorder %s24, 3
      %p42 = por %p40, %p41
      %p43 = scmp.ne.s32.totalorder %s32, %s33
      %p44 = scmp.eq.s32.totalorder %s24, 0
      %p45 = por %p43, %p44
      %p46 = scmp.ne.s32.totalorder %s32, %s33
      %p47 = scmp.eq.s32.totalorder %s25, 3
      %p48 = por %p46, %p47
      %p50 = scmp.ne.s32.totalorder %s33, %s49
      %p51 = scmp.eq.s32.totalorder %s25, 0
      %p52 = por %p50, %p51
      %s53 = ssub.s32 %s19, %s26
      %p54 = scmp.eq.s32.totalorder %s53, 0
      %s56 = sadd.s32 %s55, 1
      %s57 = scalar_select %p54, %s55, %s56
      %p60 = pneg %p54
      %p61 = scmp.eq.s32.totalorder %s19, 3
      %p62 = por %p60, %p61
      %p63 = scmp.ne.s32.totalorder %s55, %s58
      %p64 = scmp.eq.s32.totalorder %s19, 0
      %p65 = por %p63, %p64
      %p66 = scmp.ne.s32.totalorder %s55, %s58
      %p67 = scmp.eq.s32.totalorder %s24, 3
      %p68 = por %p66, %p67
      %p69 = scmp.ne.s32.totalorder %s58, %s59
      %p70 = scmp.eq.s32.totalorder %s24, 0
      %p71 = por %p69, %p70
      %p72 = scmp.ne.s32.totalorder %s58, %s59
      %p73 = scmp.eq.s32.totalorder %s25, 3
      %p74 = por %p72, %p73
      %p76 = scmp.ne.s32.totalorder %s59, %s75
      %p77 = scmp.eq.s32.totalorder %s25, 0
      %p78 = por %p76, %p77
      %s80 = sadd.s32 %s79, 1
      %p83 = scmp.eq.s32.totalorder %s19, 3
      %p84 = scmp.ne.s32.totalorder %s79, %s81
      %p85 = scmp.eq.s32.totalorder %s19, 0
      %p86 = por %p84, %p85
      %p87 = scmp.ne.s32.totalorder %s79, %s81
      %p88 = scmp.eq.s32.totalorder %s24, 3
      %p89 = por %p87, %p88
      %p90 = scmp.ne.s32.totalorder %s81, %s82
      %p91 = scmp.eq.s32.totalorder %s24, 0
      %p92 = por %p90, %p91
      %p93 = scmp.ne.s32.totalorder %s81, %s82
      %p94 = scmp.eq.s32.totalorder %s25, 3
      %p95 = por %p93, %p94
      %p97 = scmp.ne.s32.totalorder %s82, %s96
      %p98 = scmp.eq.s32.totalorder %s25, 0
      %p99 = por %p97, %p98
      %s101 = sadd.s32 %s100, 1
      %p104 = scmp.eq.s32.totalorder %s19, 3
      %p105 = scmp.ne.s32.totalorder %s100, %s102
      %p106 = scmp.eq.s32.totalorder %s19, 0
      %p107 = por %p105, %p106
      %p108 = scmp.ne.s32.totalorder %s100, %s102
      %p109 = scmp.eq.s32.totalorder %s24, 3
      %p110 = por %p108, %p109
      %p111 = scmp.ne.s32.totalorder %s102, %s103
      %p112 = scmp.eq.s32.totalorder %s24, 0
      %p113 = por %p111, %p112
      %p114 = scmp.ne.s32.totalorder %s102, %s103
      %p115 = scmp.eq.s32.totalorder %s25, 3
      %p116 = por %p114, %p115
      %p118 = scmp.ne.s32.totalorder %s103, %s117
      %p119 = scmp.eq.s32.totalorder %s25, 0
      %p120 = por %p118, %p119
      %s122 = sadd.s32 %s121, 1
      %p125 = scmp.eq.s32.totalorder %s19, 3
      %p126 = scmp.ne.s32.totalorder %s121, %s123
      %p127 = scmp.eq.s32.totalorder %s19, 0
      %p128 = por %p126, %p127
      %p129 = scmp.ne.s32.totalorder %s121, %s123
      %p130 = scmp.eq.s32.totalorder %s24, 3
      %p131 = por %p129, %p130
      %p132 = scmp.ne.s32.totalorder %s123, %s124
      %p133 = scmp.eq.s32.totalorder %s24, 0
      %p134 = por %p132, %p133
      %p135 = scmp.ne.s32.totalorder %s123, %s124
      %p136 = scmp.eq.s32.totalorder %s25, 3
      %p137 = por %p135, %p136
      %p139 = scmp.ne.s32.totalorder %s124, %s138
      %p140 = scmp.eq.s32.totalorder %s25, 0
      %p141 = por %p139, %p140
      %s143 = sadd.s32 %s142, 1
      %p146 = scmp.eq.s32.totalorder %s19, 3
      %p147 = scmp.ne.s32.totalorder %s142, %s144
      %p148 = scmp.eq.s32.totalorder %s19, 0
      %p149 = por %p147, %p148
      %p150 = scmp.ne.s32.totalorder %s142, %s144
      %p151 = scmp.eq.s32.totalorder %s24, 3
      %p152 = por %p150, %p151
      %p153 = scmp.ne.s32.totalorder %s144, %s145
      %p154 = scmp.eq.s32.totalorder %s24, 0
      %p155 = por %p153, %p154
      %p156 = scmp.ne.s32.totalorder %s144, %s145
      %p157 = scmp.eq.s32.totalorder %s25, 3
      %p158 = por %p156, %p157
      %p160 = scmp.ne.s32.totalorder %s145, %s159
      %p161 = scmp.eq.s32.totalorder %s25, 0
      %p162 = por %p160, %p161
      %s163 = ssub.s32 %s19, %s26
      %p164 = scmp.eq.s32.totalorder %s163, 0
      %s166 = sadd.s32 %s165, 1
      %s167 = scalar_select %p164, %s165, %s166
      %p170 = pneg %p164
      %p171 = scmp.eq.s32.totalorder %s19, 3
      %p172 = por %p170, %p171
      %p173 = scmp.ne.s32.totalorder %s165, %s168
      %p174 = scmp.eq.s32.totalorder %s19, 0
      %p175 = por %p173, %p174
      %p176 = scmp.ne.s32.totalorder %s165, %s168
      %p177 = scmp.eq.s32.totalorder %s24, 3
      %p178 = por %p176, %p177
      %p179 = scmp.ne.s32.totalorder %s168, %s169
      %p180 = scmp.eq.s32.totalorder %s24, 0
      %p181 = por %p179, %p180
      %p182 = scmp.ne.s32.totalorder %s168, %s169
      %p183 = scmp.eq.s32.totalorder %s25, 3
      %p184 = por %p182, %p183
      %p186 = scmp.ne.s32.totalorder %s169, %s185
      %p187 = scmp.eq.s32.totalorder %s25, 0
      %p188 = por %p186, %p187
      %p189 = scmp.le.s32.totalorder 1, %s19
      %p190 = scmp.lt.s32.totalorder %s19, 5
      %p191 = pnand %p189, %p190
      %p192 = pneg %p191
      // Predicated region
      $region9: #{tpu_custom_call.1} parent=5 // pred_check
        _
      $region10: #{tpu_custom_call.1} parent=5 // pred_check_branch
        %194 = sbr.rel (%p191) target = $region12
      $region11: #{tpu_custom_call.1} parent=5 // pred_region
        %s195 = ssub.s32 %s19, 1
        // Predicated region
        $region13: #{tpu_custom_call.1} parent=11 // pred_check
          %p196 = pneg %p92
        $region14: #{tpu_custom_call.1} parent=11 // pred_check_branch
          %198 = sbr.rel (%p196) target = $region16
        $region15: #{tpu_custom_call.1} parent=11 // pred_region
          _
        $region16: #{tpu_custom_call.1} parent=11 // pred_fallthru
          _
        // Predicated region
        $region17: #{tpu_custom_call.1} parent=11 // pred_check
          %p199 = pneg %p113
        $region18: #{tpu_custom_call.1} parent=11 // pred_check_branch
          %201 = sbr.rel (%p199) target = $region20
        $region19: #{tpu_custom_call.1} parent=11 // pred_region
          _
        $region20: #{tpu_custom_call.1} parent=11 // pred_fallthru
          _
        // Predicated region
        $region21: #{tpu_custom_call.1} parent=11 // pred_check
          %p202 = pneg %p134
        $region22: #{tpu_custom_call.1} parent=11 // pred_check_branch
          %204 = sbr.rel (%p202) target = $region24
        $region23: #{tpu_custom_call.1} parent=11 // pred_region
          %s206 = ssub.s32 8192, 8192
          %207 = vsyncadd [#allocation6], %s206
          %s208 = sshll.u32 [#allocation5], 4
          %s209 = int_to_ptr.vmem [resolvable:$true] %s208
          %214 = dma.hbm_to_vmem [thread:$0]  %s4, 8192, %s209, [#allocation6], 256, 256, 16
        $region24: #{tpu_custom_call.1} parent=11 // pred_fallthru
          _
        // Predicated region
        $region25: #{tpu_custom_call.1} parent=11 // pred_check
          %p215 = pneg %p155
        $region26: #{tpu_custom_call.1} parent=11 // pred_check_branch
          %217 = sbr.rel (%p215) target = $region28
        $region27: #{tpu_custom_call.1} parent=11 // pred_region
          _
        $region28: #{tpu_custom_call.1} parent=11 // pred_fallthru
          _
      $region12: #{tpu_custom_call.1} parent=5 // pred_fallthru
        _
      %p218 = scmp.lt.s32.totalorder %s19, 4
      // Predicated region
      $region29: #{tpu_custom_call.1} parent=5 // pred_check
        %p219 = pneg %p218
      $region30: #{tpu_custom_call.1} parent=5 // pred_check_branch
        %221 = sbr.rel (%p219) target = $region32
      $region31: #{tpu_custom_call.1} parent=5 // pred_region
        // Predicated region
        $region33: #{tpu_custom_call.1} parent=31 // pred_check
          %p222 = pneg %p39
        $region34: #{tpu_custom_call.1} parent=31 // pred_check_branch
          %224 = sbr.rel (%p222) target = $region36
        $region35: #{tpu_custom_call.1} parent=31 // pred_region
          %s225 = sand.u32 %s29, 1
          %s226 = scalar_lea.sflag [#allocation3], %s225
          %s227 = sand.u32 %s29, 1
          %s228 = smul.addr %s227, 128
          %s229 = scalar_lea.vmem [#allocation2], %s228
          %s230 = smul.u32 8, %s19
          %s231 = ssub.s32 25, %s230
          %p232 = scmp.lt.s32.totalorder %s231, 8
          %s233 = scalar_select %p232, %s231, 8
          %s234 = smul.u32 128, %s233
          %s235 = smul.u32 %s234, 2
          %s237 = ssub.s32 2048, %s235
          %238 = vsyncadd %s226, %s237
          %p239 = scmp.ne.s32.totalorder 0, %s235
          %s240 = smul.addr %s230, 2
          %s241 = smul.addr %s240, 128
          %s242 = scalar_lea.hbm %s0, %s241
          %s243 = smul.u32 16, %s233
          %s244 = sshll.u32 %s229, 4
          %s245 = int_to_ptr.vmem [resolvable:$true] %s244
          %s246 = sshll.u32 %s243, 4
          %250 = dma.hbm_to_vmem [thread:$0]  (%p239), %s242, %s246, %s245, %s226, 256, 256, 16
        $region36: #{tpu_custom_call.1} parent=31 // pred_fallthru
          _
        // Predicated region
        $region37: #{tpu_custom_call.1} parent=31 // pred_check
          %p251 = pneg %p65
        $region38: #{tpu_custom_call.1} parent=31 // pred_check_branch
          %253 = sbr.rel (%p251) target = $region40
        $region39: #{tpu_custom_call.1} parent=31 // pred_region
          %s254 = smul.u32 8, %s19
          %s255 = ssub.s32 25, %s254
          %p256 = scmp.lt.s32.totalorder %s255, 8
          %s257 = scalar_select %p256, %s255, 8
          %s258 = smul.u32 128, %s257
          %p259 = scmp.lt.s32.totalorder %s254, 24
          %s260 = scalar_select %p259, %s254, 24
          %s261 = smul.addr %s260, 8
          %s262 = scalar_lea.vmem %s1, %s261
          %s263 = smul.u32 8, %s19
          %s264 = ssub.s32 25, %s263
          %p265 = scmp.lt.s32.totalorder %s264, 8
          %s266 = scalar_select %p265, %s264, 8
          %s267 = smul.u32 128, %s266
        $region40: #{tpu_custom_call.1} parent=31 // pred_fallthru
          _
      $region32: #{tpu_custom_call.1} parent=5 // pred_fallthru
        _
      %p268 = scmp.le.s32.totalorder 1, %s19
      %p269 = scmp.lt.s32.totalorder %s19, 5
      %p270 = pnand %p268, %p269
      %p271 = pneg %p270
      // Predicated region
      $region41: #{tpu_custom_call.1} parent=5 // pred_check
        _
      $region42: #{tpu_custom_call.1} parent=5 // pred_check_branch
        %273 = sbr.rel (%p270) target = $region44
      $region43: #{tpu_custom_call.1} parent=5 // pred_region
        %s274 = ssub.s32 %s19, 1
        %s275 = sand.u32 %s32, 1
        %s276 = scalar_lea.sflag [#allocation3], %s275
        %s277 = sand.u32 %s32, 1
        %s278 = smul.addr %s277, 128
        %s279 = scalar_lea.vmem [#allocation2], %s278
        // Predicated region
        $region45: #{tpu_custom_call.1} parent=43 // pred_check
          %p280 = pneg %p45
        $region46: #{tpu_custom_call.1} parent=43 // pred_check_branch
          %282 = sbr.rel (%p280) target = $region48
        $region47: #{tpu_custom_call.1} parent=43 // pred_region
          %283 = dma.done %s276, 2048
        $region48: #{tpu_custom_call.1} parent=43 // pred_fallthru
          _
        // Predicated region
        $region49: #{tpu_custom_call.1} parent=43 // pred_check
          %p284 = pneg %p134
        $region50: #{tpu_custom_call.1} parent=43 // pred_check_branch
          %286 = sbr.rel (%p284) target = $region52
        $region51: #{tpu_custom_call.1} parent=43 // pred_region
          %287 = dma.done [#allocation6], 8192
        $region52: #{tpu_custom_call.1} parent=43 // pred_fallthru
          _
        %s288 = sand.u32 %s32, 1
        %s289 = scalar_lea.sflag [#allocation3], %s288
        %s290 = sand.u32 %s32, 1
        %s291 = smul.addr %s290, 128
        %s292 = scalar_lea.vmem [#allocation2], %s291
        %p293 = pneg %p45
        %p294 = pneg %p42
        %s295 = smul.u32 8, %s24
        %s296 = ssub.s32 25, %s295
        %p297 = scmp.lt.s32.totalorder %s296, 8
        %s298 = scalar_select %p297, %s296, 8
        %s299 = smul.u32 128, %s298
        %p300 = scmp.lt.s32.totalorder %s295, 24
        %s301 = scalar_select %p300, %s295, 24
        %s302 = smul.addr %s301, 8
        %s303 = scalar_lea.vmem %s1, %s302
        %p304 = pneg %p71
        %p305 = pneg %p68
        %p306 = pneg %p92
        %p307 = pneg %p89
        %p308 = pneg %p113
        %p309 = pneg %p110
        %p310 = pneg %p134
        %p311 = pneg %p131
        %p312 = pneg %p155
        %p313 = pneg %p152
        %p314 = pneg %p181
        %p315 = pneg %p178
        %s316 = sand.u32 %s168, 1
        %s317 = scalar_lea.sflag [#allocation4], %s316
        %s318 = sand.u32 %s168, 1
        %s319 = smul.addr %s318, 128
        %s320 = scalar_lea.vmem [#allocation7], %s319
        %s321 = smul.u32 8, %s24
        %s322 = ssub.s32 25, %s321
        %p323 = scmp.lt.s32.totalorder %s322, 8
        %s324 = scalar_select %p323, %s322, 8
        %s325 = smul.u32 128, %s324
        %s326 = smul.u32 %s325, 2
        %s327 = smul.u32 8, %s24
        %s328 = ssub.s32 25, %s327
        %p329 = scmp.lt.s32.totalorder %s328, 8
        %s330 = scalar_select %p329, %s328, 8
        %s331 = smul.u32 128, %s330
        %p332 = scmp.lt.s32.totalorder %s327, 24
        %s333 = scalar_select %p332, %s327, 24
        %s334 = smul.addr %s333, 8
        %s335 = scalar_lea.vmem %s1, %s334
        %s336 = smul.u32 8, %s24
        %s337 = ssub.s32 25, %s336
        %p338 = scmp.lt.s32.totalorder %s337, 8
        %s339 = scalar_select %p338, %s337, 8
        %s340 = smul.u32 128, %s339
        %s341 = smul.u32 8, %s24
        %s342 = ssub.s32 25, %s341
        %p343 = scmp.lt.s32.totalorder %s342, 8
        %s344 = scalar_select %p343, %s342, 8
        %s345 = smul.u32 128, %s344
        %s346 = smul.u32 %s345, 2
        %v348 = vld [vmem:[%s279] sm:$0xff]
        %v349 = vld [vmem:[%s279 + $0x8] sm:$0xff]
        %v350 = vld [vmem:[%s279 + $0x10] sm:$0xff]
        %v351 = vld [vmem:[%s279 + $0x18] sm:$0xff]
        %v352 = vld [vmem:[%s279 + $0x20] sm:$0xff]
        %v353 = vld [vmem:[%s279 + $0x28] sm:$0xff]
        %v354 = vld [vmem:[%s279 + $0x30] sm:$0xff]
        %v355 = vld [vmem:[%s279 + $0x38] sm:$0xff]
        %v356 = vld [vmem:[%s279 + $0x40] sm:$0xff]
        %v357 = vld [vmem:[%s279 + $0x48] sm:$0xff]
        %v358 = vld [vmem:[%s279 + $0x50] sm:$0xff]
        %v359 = vld [vmem:[%s279 + $0x58] sm:$0xff]
        %v360 = vld [vmem:[%s279 + $0x60] sm:$0xff]
        %v361 = vld [vmem:[%s279 + $0x68] sm:$0xff]
        %v362 = vld [vmem:[%s279 + $0x70] sm:$0xff]
        %v363 = vld [vmem:[%s279 + $0x78] sm:$0xff]
        %v364 = vadd.f32 %v348, %v349
        %365 = vadd.xlane.f32.xlu0 %v364
        %v366 = vpop.xlane.xlu0 %365
        %v367 = vadd.f32 %v350, %v351
        %368 = vadd.xlane.f32.xlu0 %v367
        %v369 = vpop.xlane.xlu0 %368
        %v370 = vadd.f32 %v352, %v353
        %371 = vadd.xlane.f32.xlu0 %v370
        %v372 = vpop.xlane.xlu0 %371
        %v373 = vadd.f32 %v354, %v355
        %374 = vadd.xlane.f32.xlu0 %v373
        %v375 = vpop.xlane.xlu0 %374
        %v376 = vadd.f32 %v356, %v357
        %377 = vadd.xlane.f32.xlu0 %v376
        %v378 = vpop.xlane.xlu0 %377
        %v379 = vadd.f32 %v358, %v359
        %380 = vadd.xlane.f32.xlu0 %v379
        %v381 = vpop.xlane.xlu0 %380
        %v382 = vadd.f32 %v360, %v361
        %383 = vadd.xlane.f32.xlu0 %v382
        %v384 = vpop.xlane.xlu0 %383
        %v385 = vadd.f32 %v362, %v363
        %386 = vadd.xlane.f32.xlu0 %v385
        %v387 = vpop.xlane.xlu0 %386
        %v388 = vrcp.pop 256.0
        %v389 = vmul.f32 %v366, %v388
        %v390 = vmul.f32 %v369, %v388
        %v391 = vmul.f32 %v372, %v388
        %v392 = vmul.f32 %v375, %v388
        %v393 = vmul.f32 %v378, %v388
        %v394 = vmul.f32 %v381, %v388
        %v395 = vmul.f32 %v384, %v388
        %v396 = vmul.f32 %v387, %v388
        %v397 = vmul.f32 %v348, %v348
        %v398 = vmul.f32 %v349, %v349
        %v399 = vmul.f32 %v350, %v350
        %v400 = vmul.f32 %v351, %v351
        %v401 = vmul.f32 %v352, %v352
        %v402 = vmul.f32 %v353, %v353
        %v403 = vmul.f32 %v354, %v354
        %v404 = vmul.f32 %v355, %v355
        %v405 = vmul.f32 %v356, %v356
        %v406 = vmul.f32 %v357, %v357
        %v407 = vmul.f32 %v358, %v358
        %v408 = vmul.f32 %v359, %v359
        %v409 = vmul.f32 %v360, %v360
        %v410 = vmul.f32 %v361, %v361
        %v411 = vmul.f32 %v362, %v362
        %v412 = vmul.f32 %v363, %v363
        %v413 = vadd.f32 %v397, %v398
        %414 = vadd.xlane.f32.xlu0 %v413
        %v415 = vpop.xlane.xlu0 %414
        %v416 = vadd.f32 %v399, %v400
        %417 = vadd.xlane.f32.xlu0 %v416
        %v418 = vpop.xlane.xlu0 %417
        %v419 = vadd.f32 %v401, %v402
        %420 = vadd.xlane.f32.xlu0 %v419
        %v421 = vpop.xlane.xlu0 %420
        %v422 = vadd.f32 %v403, %v404
        %423 = vadd.xlane.f32.xlu0 %v422
        %v424 = vpop.xlane.xlu0 %423
        %v425 = vadd.f32 %v405, %v406
        %426 = vadd.xlane.f32.xlu0 %v425
        %v427 = vpop.xlane.xlu0 %426
        %v428 = vadd.f32 %v407, %v408
        %429 = vadd.xlane.f32.xlu0 %v428
        %v430 = vpop.xlane.xlu0 %429
        %v431 = vadd.f32 %v409, %v410
        %432 = vadd.xlane.f32.xlu0 %v431
        %v433 = vpop.xlane.xlu0 %432
        %v434 = vadd.f32 %v411, %v412
        %435 = vadd.xlane.f32.xlu0 %v434
        %v436 = vpop.xlane.xlu0 %435
        %v437 = vmul.f32 %v415, %v388
        %v438 = vmul.f32 %v418, %v388
        %v439 = vmul.f32 %v421, %v388
        %v440 = vmul.f32 %v424, %v388
        %v441 = vmul.f32 %v427, %v388
        %v442 = vmul.f32 %v430, %v388
        %v443 = vmul.f32 %v433, %v388
        %v444 = vmul.f32 %v436, %v388
        %v445 = vmul.f32 %v389, %v389
        %v446 = vmul.f32 %v390, %v390
        %v447 = vmul.f32 %v391, %v391
        %v448 = vmul.f32 %v392, %v392
        %v449 = vmul.f32 %v393, %v393
        %v450 = vmul.f32 %v394, %v394
        %v451 = vmul.f32 %v395, %v395
        %v452 = vmul.f32 %v396, %v396
        %v453 = vsub.f32 %v437, %v445
        %v454 = vsub.f32 %v438, %v446
        %v455 = vsub.f32 %v439, %v447
        %v456 = vsub.f32 %v440, %v448
        %v457 = vsub.f32 %v441, %v449
        %v458 = vsub.f32 %v442, %v450
        %v459 = vsub.f32 %v443, %v451
        %v460 = vsub.f32 %v444, %v452
        %v461 = vmax.f32 %v453, 0.0
        %v462 = vmax.f32 %v454, 0.0
        %v463 = vmax.f32 %v455, 0.0
        %v464 = vmax.f32 %v456, 0.0
        %v465 = vmax.f32 %v457, 0.0
        %v466 = vmax.f32 %v458, 0.0
        %v467 = vmax.f32 %v459, 0.0
        %v468 = vmax.f32 %v460, 0.0
        %v469 = vsub.f32 %v348, %v389
        %v470 = vsub.f32 %v349, %v389
        %v471 = vsub.f32 %v350, %v390
        %v472 = vsub.f32 %v351, %v390
        %v473 = vsub.f32 %v352, %v391
        %v474 = vsub.f32 %v353, %v391
        %v475 = vsub.f32 %v354, %v392
        %v476 = vsub.f32 %v355, %v392
        %v477 = vsub.f32 %v356, %v393
        %v478 = vsub.f32 %v357, %v393
        %v479 = vsub.f32 %v358, %v394
        %v480 = vsub.f32 %v359, %v394
        %v481 = vsub.f32 %v360, %v395
        %v482 = vsub.f32 %v361, %v395
        %v483 = vsub.f32 %v362, %v396
        %v484 = vsub.f32 %v363, %v396
        %v485 = vadd.f32 %v461, 1e-05
        %v486 = vadd.f32 %v462, 1e-05
        %v487 = vadd.f32 %v463, 1e-05
        %v488 = vadd.f32 %v464, 1e-05
        %v489 = vadd.f32 %v465, 1e-05
        %v490 = vadd.f32 %v466, 1e-05
        %v491 = vadd.f32 %v467, 1e-05
        %v492 = vadd.f32 %v468, 1e-05
        %v493 = vrsqrt.pop %v485
        %v494 = vrsqrt.pop %v486
        %v495 = vrsqrt.pop %v487
        %v496 = vrsqrt.pop %v488
        %v497 = vrsqrt.pop %v489
        %v498 = vrsqrt.pop %v490
        %v499 = vrsqrt.pop %v491
        %v500 = vrsqrt.pop %v492
        %v501 = vmul.f32 %v469, %v493
        %v502 = vmul.f32 %v470, %v493
        %v503 = vmul.f32 %v471, %v494
        %v504 = vmul.f32 %v472, %v494
        %v505 = vmul.f32 %v473, %v495
        %v506 = vmul.f32 %v474, %v495
        %v507 = vmul.f32 %v475, %v496
        %v508 = vmul.f32 %v476, %v496
        %v509 = vmul.f32 %v477, %v497
        %v510 = vmul.f32 %v478, %v497
        %v511 = vmul.f32 %v479, %v498
        %v512 = vmul.f32 %v480, %v498
        %v513 = vmul.f32 %v481, %v499
        %v514 = vmul.f32 %v482, %v499
        %v515 = vmul.f32 %v483, %v500
        %v516 = vmul.f32 %v484, %v500
        %v517 = vld [vmem:[%s335] sm:$0xff]
        %v518 = vld [vmem:[%s335 + $0x8] sm:$0xff]
        %v519 = vld [vmem:[%s335 + $0x10] sm:$0xff]
        %v520 = vld [vmem:[%s335 + $0x18] sm:$0xff]
        %v521 = vld [vmem:[%s335 + $0x20] sm:$0xff]
        %v522 = vld [vmem:[%s335 + $0x28] sm:$0xff]
        %v523 = vld [vmem:[%s335 + $0x30] sm:$0xff]
        %v524 = vld [vmem:[%s335 + $0x38] sm:$0xff]
        %v525 = vpack.c.bf16 %v518, %v517
        %v526 = vpack.c.bf16 %v520, %v519
        %v527 = vpack.c.bf16 %v522, %v521
        %v528 = vpack.c.bf16 %v524, %v523
        %v529 = vld [vmem:[%s2] sm:$0xff]
        %v530 = vld [vmem:[%s2 + $0x8] sm:$0xff]
        %v531 = vld [vmem:[%s2 + $0x10] sm:$0xff]
        %v532 = vld [vmem:[%s2 + $0x18] sm:$0xff]
        %v533 = vld [vmem:[%s3] sm:$0x3]
        %v535 = vlaneseq
        %v536 = vshrl.u32 %v535, 7
        %v537 = vsub.s32 0, %v536
        %v538 = vrot.slane %v533, %v537
        %v539 = vlaneseq
        %v540 = vshrl.u32 %v539, 7
        %v541 = vsub.s32 1, %v540
        %v542 = vrot.slane %v533, %v541
        %v549 = vunpack.c.l.b16 %v529
        %v550 = vunpack.c.h.b16 %v529
        %v551 = vunpack.c.l.b16 %v530
        %v552 = vunpack.c.h.b16 %v530
        %v553 = vunpack.c.l.b16 %v531
        %v554 = vunpack.c.h.b16 %v531
        %v555 = vunpack.c.l.b16 %v532
        %v556 = vunpack.c.h.b16 %v532
        %v557 = vpack.c.b16 %v551, %v549
        %v558 = vpack.c.b16 %v552, %v550
        %v559 = vpack.c.b16 %v555, %v553
        %v560 = vpack.c.b16 %v556, %v554
        %vm565 = vcmask 261120
        %v567 = vsel %vm565, %v525, 0
        %v570 = vsel %vm565, %v526, 0
        %v573 = vsel %vm565, %v527, 0
        %v576 = vsel %vm565, %v528, 0
        %578 = vmatprep.subr.bf16.mxu0 %v558
        %579 = vmatpush1.bf16.msra.mxu0 %v557
        %580 = vmatprep.subr.bf16.mxu0 %v560
        %581 = vmatpush1.bf16.msra.mxu0 %v559
        %582 = vmatprep.subr.bf16.mxu0 0
        %583 = vmatpush1.bf16.msra.mxu0 0
        %584 = vmatprep.subr.bf16.mxu0 0
        %585 = vmatpush1.bf16.msra.mxu0 0
        %586 = vmatprep.subr.bf16.mxu0 0
        %587 = vmatpush1.bf16.msra.mxu0 0
        %588 = vmatprep.subr.bf16.mxu0 0
        %589 = vmatpush1.bf16.msra.mxu0 0
        %590 = vmatprep.subr.bf16.mxu0 0
        %591 = vmatpush1.bf16.msra.mxu0 0
        %592 = vmatprep.subr.bf16.mxu0 0
        %593 = vmatpush1.bf16.msra.mxu0 0
        %594 = vmatprep.subr.bf16.mxu0 0
        %595 = vmatpush1.bf16.msra.mxu0 0
        %596 = vmatprep.subr.bf16.mxu0 0
        %597 = vmatpush1.bf16.msra.mxu0 0
        %598 = vmatprep.subr.bf16.mxu0 0
        %599 = vmatpush1.bf16.msra.mxu0 0
        %600 = vmatprep.subr.bf16.mxu0 0
        %601 = vmatpush1.bf16.msra.mxu0 0
        %602 = vmatprep.subr.bf16.mxu0 0
        %603 = vmatpush1.bf16.msra.mxu0 0
        %604 = vmatprep.subr.bf16.mxu0 0
        %605 = vmatpush1.bf16.msra.mxu0 0
        %606 = vmatprep.subr.bf16.mxu0 0
        %607 = vmatpush1.bf16.msra.mxu0 0
        %608 = vmatprep.subr.bf16.mxu0 0
        %609 = vmatpush1.bf16.msra.mxu0 0
        %610 = vmatprep.mubr.bf16.mxu0 0
        %611 = vmatmul.mubr.bf16.gmra.mrb[0].mxu0 %v567
        %v612 = vpop.f32.mrb[0].mxu0
        %v613 = vadd.f32 %v538, %v612
        %v614 = vpop.f32.mrb[0].mxu0
        %v615 = vadd.f32 %v542, %v614
        %v616 = vpop.f32.mrb[0].mxu0
        %v617 = vadd.f32 %v538, %v616
        %v618 = vpop.f32.mrb[0].mxu0
        %v619 = vadd.f32 %v542, %v618
        %620 = vmatprep.mubr.bf16.mxu0 0
        %621 = vmatmul.mubr.bf16.gmra.mrb[0].mxu0 %v570
        %v622 = vpop.f32.mrb[0].mxu0
        %v623 = vadd.f32 %v538, %v622
        %v624 = vpop.f32.mrb[0].mxu0
        %v625 = vadd.f32 %v542, %v624
        %v626 = vpop.f32.mrb[0].mxu0
        %v627 = vadd.f32 %v538, %v626
        %v628 = vpop.f32.mrb[0].mxu0
        %v629 = vadd.f32 %v542, %v628
        %630 = vmatprep.mubr.bf16.mxu0 0
        %631 = vmatmul.mubr.bf16.gmra.mrb[0].mxu0 %v573
        %v632 = vpop.f32.mrb[0].mxu0
        %v633 = vadd.f32 %v538, %v632
        %v634 = vpop.f32.mrb[0].mxu0
        %v635 = vadd.f32 %v542, %v634
        %v636 = vpop.f32.mrb[0].mxu0
        %v637 = vadd.f32 %v538, %v636
        %v638 = vpop.f32.mrb[0].mxu0
        %v639 = vadd.f32 %v542, %v638
        %640 = vmatprep.mubr.bf16.mxu0 0
        %641 = vmatmul.mubr.bf16.gmra.mrb[0].mxu0 %v576
        %v642 = vpop.f32.mrb[0].mxu0
        %v643 = vadd.f32 %v538, %v642
        %v644 = vpop.f32.mrb[0].mxu0
        %v645 = vadd.f32 %v542, %v644
        %v646 = vpop.f32.mrb[0].mxu0
        %v647 = vadd.f32 %v538, %v646
        %v648 = vpop.f32.mrb[0].mxu0
        %v649 = vadd.f32 %v542, %v648
        %650 = vdwg.mxu0
        %v651 = vmax.f32 %v613, 0.0
        %v652 = vmax.f32 %v615, 0.0
        %v653 = vmax.f32 %v617, 0.0
        %v654 = vmax.f32 %v619, 0.0
        %v655 = vmax.f32 %v623, 0.0
        %v656 = vmax.f32 %v625, 0.0
        %v657 = vmax.f32 %v627, 0.0
        %v658 = vmax.f32 %v629, 0.0
        %v659 = vmax.f32 %v633, 0.0
        %v660 = vmax.f32 %v635, 0.0
        %v661 = vmax.f32 %v637, 0.0
        %v662 = vmax.f32 %v639, 0.0
        %v663 = vmax.f32 %v643, 0.0
        %v664 = vmax.f32 %v645, 0.0
        %v665 = vmax.f32 %v647, 0.0
        %v666 = vmax.f32 %v649, 0.0
        %v667 = vpack.c.bf16 %v653, %v651
        %v668 = vpack.c.bf16 %v654, %v652
        %v669 = vpack.c.bf16 %v657, %v655
        %v670 = vpack.c.bf16 %v658, %v656
        %v671 = vpack.c.bf16 %v661, %v659
        %v672 = vpack.c.bf16 %v662, %v660
        %v673 = vpack.c.bf16 %v665, %v663
        %v674 = vpack.c.bf16 %v666, %v664
        %v675 = vld [vmem:[#allocation5] sm:$0xff]
        %v676 = vld [vmem:[#allocation5 + $0x8] sm:$0xff]
        %v677 = vld [vmem:[#allocation5 + $0x10] sm:$0xff]
        %v678 = vld [vmem:[#allocation5 + $0x18] sm:$0xff]
        %v679 = vld [vmem:[#allocation5 + $0x20] sm:$0xff]
        %v680 = vld [vmem:[#allocation5 + $0x28] sm:$0xff]
        %v681 = vld [vmem:[#allocation5 + $0x30] sm:$0xff]
        %v682 = vld [vmem:[#allocation5 + $0x38] sm:$0xff]
        %v683 = vld [vmem:[#allocation5 + $0x40] sm:$0xff]
        %v684 = vld [vmem:[#allocation5 + $0x48] sm:$0xff]
        %v685 = vld [vmem:[#allocation5 + $0x50] sm:$0xff]
        %v686 = vld [vmem:[#allocation5 + $0x58] sm:$0xff]
        %v687 = vld [vmem:[#allocation5 + $0x60] sm:$0xff]
        %v688 = vld [vmem:[#allocation5 + $0x68] sm:$0xff]
        %v689 = vld [vmem:[#allocation5 + $0x70] sm:$0xff]
        %v690 = vld [vmem:[#allocation5 + $0x78] sm:$0xff]
        %v691 = vld [vmem:[#allocation5 + $0x80] sm:$0xff]
        %v692 = vld [vmem:[#allocation5 + $0x88] sm:$0xff]
        %v693 = vld [vmem:[#allocation5 + $0x90] sm:$0xff]
        %v694 = vld [vmem:[#allocation5 + $0x98] sm:$0xff]
        %v695 = vld [vmem:[#allocation5 + $0xa0] sm:$0xff]
        %v696 = vld [vmem:[#allocation5 + $0xa8] sm:$0xff]
        %v697 = vld [vmem:[#allocation5 + $0xb0] sm:$0xff]
        %v698 = vld [vmem:[#allocation5 + $0xb8] sm:$0xff]
        %v699 = vld [vmem:[#allocation5 + $0xc0] sm:$0xff]
        %v700 = vld [vmem:[#allocation5 + $0xc8] sm:$0xff]
        %v701 = vld [vmem:[#allocation5 + $0xd0] sm:$0xff]
        %v702 = vld [vmem:[#allocation5 + $0xd8] sm:$0xff]
        %v703 = vld [vmem:[#allocation5 + $0xe0] sm:$0xff]
        %v704 = vld [vmem:[#allocation5 + $0xe8] sm:$0xff]
        %v705 = vld [vmem:[#allocation5 + $0xf0] sm:$0xff]
        %v706 = vld [vmem:[#allocation5 + $0xf8] sm:$0xff]
        %v707 = vld [vmem:[#allocation5 + $0x100] sm:$0xff]
        %v708 = vld [vmem:[#allocation5 + $0x108] sm:$0xff]
        %v709 = vld [vmem:[#allocation5 + $0x110] sm:$0xff]
        %v710 = vld [vmem:[#allocation5 + $0x118] sm:$0xff]
        %v711 = vld [vmem:[#allocation5 + $0x120] sm:$0xff]
        %v712 = vld [vmem:[#allocation5 + $0x128] sm:$0xff]
        %v713 = vld [vmem:[#allocation5 + $0x130] sm:$0xff]
        %v714 = vld [vmem:[#allocation5 + $0x138] sm:$0xff]
        %v715 = vld [vmem:[#allocation5 + $0x140] sm:$0xff]
        %v716 = vld [vmem:[#allocation5 + $0x148] sm:$0xff]
        %v717 = vld [vmem:[#allocation5 + $0x150] sm:$0xff]
        %v718 = vld [vmem:[#allocation5 + $0x158] sm:$0xff]
        %v719 = vld [vmem:[#allocation5 + $0x160] sm:$0xff]
        %v720 = vld [vmem:[#allocation5 + $0x168] sm:$0xff]
        %v721 = vld [vmem:[#allocation5 + $0x170] sm:$0xff]
        %v722 = vld [vmem:[#allocation5 + $0x178] sm:$0xff]
        %v723 = vld [vmem:[#allocation5 + $0x180] sm:$0xff]
        %v724 = vld [vmem:[#allocation5 + $0x188] sm:$0xff]
        %v725 = vld [vmem:[#allocation5 + $0x190] sm:$0xff]
        %v726 = vld [vmem:[#allocation5 + $0x198] sm:$0xff]
        %v727 = vld [vmem:[#allocation5 + $0x1a0] sm:$0xff]
        %v728 = vld [vmem:[#allocation5 + $0x1a8] sm:$0xff]
        %v729 = vld [vmem:[#allocation5 + $0x1b0] sm:$0xff]
        %v730 = vld [vmem:[#allocation5 + $0x1b8] sm:$0xff]
        %v731 = vld [vmem:[#allocation5 + $0x1c0] sm:$0xff]
        %v732 = vld [vmem:[#allocation5 + $0x1c8] sm:$0xff]
        %v733 = vld [vmem:[#allocation5 + $0x1d0] sm:$0xff]
        %v734 = vld [vmem:[#allocation5 + $0x1d8] sm:$0xff]
        %v735 = vld [vmem:[#allocation5 + $0x1e0] sm:$0xff]
        %v736 = vld [vmem:[#allocation5 + $0x1e8] sm:$0xff]
        %v737 = vld [vmem:[#allocation5 + $0x1f0] sm:$0xff]
        %v738 = vld [vmem:[#allocation5 + $0x1f8] sm:$0xff]
        %v739 = vld [vmem:[%s5] sm:$0xf]
        %v741 = vlaneseq
        %v742 = vshrl.u32 %v741, 7
        %v743 = vsub.s32 0, %v742
        %v744 = vrot.slane %v739, %v743
        %v745 = vlaneseq
        %v746 = vshrl.u32 %v745, 7
        %v747 = vsub.s32 1, %v746
        %v748 = vrot.slane %v739, %v747
        %v749 = vlaneseq
        %v750 = vshrl.u32 %v749, 7
        %v751 = vsub.s32 2, %v750
        %v752 = vrot.slane %v739, %v751
        %v753 = vlaneseq
        %v754 = vshrl.u32 %v753, 7
        %v755 = vsub.s32 3, %v754
        %v756 = vrot.slane %v739, %v755
        %v825 = vunpack.c.l.b16 %v675
        %v826 = vunpack.c.h.b16 %v675
        %v827 = vunpack.c.l.b16 %v676
        %v828 = vunpack.c.h.b16 %v676
        %v829 = vunpack.c.l.b16 %v677
        %v830 = vunpack.c.h.b16 %v677
        %v831 = vunpack.c.l.b16 %v678
        %v832 = vunpack.c.h.b16 %v678
        %v833 = vunpack.c.l.b16 %v679
        %v834 = vunpack.c.h.b16 %v679
        %v835 = vunpack.c.l.b16 %v680
        %v836 = vunpack.c.h.b16 %v680
        %v837 = vunpack.c.l.b16 %v681
        %v838 = vunpack.c.h.b16 %v681
        %v839 = vunpack.c.l.b16 %v682
        %v840 = vunpack.c.h.b16 %v682
        %v841 = vunpack.c.l.b16 %v683
        %v842 = vunpack.c.h.b16 %v683
        %v843 = vunpack.c.l.b16 %v684
        %v844 = vunpack.c.h.b16 %v684
        %v845 = vunpack.c.l.b16 %v685
        %v846 = vunpack.c.h.b16 %v685
        %v847 = vunpack.c.l.b16 %v686
        %v848 = vunpack.c.h.b16 %v686
        %v849 = vunpack.c.l.b16 %v687
        %v850 = vunpack.c.h.b16 %v687
        %v851 = vunpack.c.l.b16 %v688
        %v852 = vunpack.c.h.b16 %v688
        %v853 = vunpack.c.l.b16 %v689
        %v854 = vunpack.c.h.b16 %v689
        %v855 = vunpack.c.l.b16 %v690
        %v856 = vunpack.c.h.b16 %v690
        %v857 = vunpack.c.l.b16 %v691
        %v858 = vunpack.c.h.b16 %v691
        %v859 = vunpack.c.l.b16 %v692
        %v860 = vunpack.c.h.b16 %v692
        %v861 = vunpack.c.l.b16 %v693
        %v862 = vunpack.c.h.b16 %v693
        %v863 = vunpack.c.l.b16 %v694
        %v864 = vunpack.c.h.b16 %v694
        %v865 = vunpack.c.l.b16 %v695
        %v866 = vunpack.c.h.b16 %v695
        %v867 = vunpack.c.l.b16 %v696
        %v868 = vunpack.c.h.b16 %v696
        %v869 = vunpack.c.l.b16 %v697
        %v870 = vunpack.c.h.b16 %v697
        %v871 = vunpack.c.l.b16 %v698
        %v872 = vunpack.c.h.b16 %v698
        %v873 = vunpack.c.l.b16 %v699
        %v874 = vunpack.c.h.b16 %v699
        %v875 = vunpack.c.l.b16 %v700
        %v876 = vunpack.c.h.b16 %v700
        %v877 = vunpack.c.l.b16 %v701
        %v878 = vunpack.c.h.b16 %v701
        %v879 = vunpack.c.l.b16 %v702
        %v880 = vunpack.c.h.b16 %v702
        %v881 = vunpack.c.l.b16 %v703
        %v882 = vunpack.c.h.b16 %v703
        %v883 = vunpack.c.l.b16 %v704
        %v884 = vunpack.c.h.b16 %v704
        %v885 = vunpack.c.l.b16 %v705
        %v886 = vunpack.c.h.b16 %v705
        %v887 = vunpack.c.l.b16 %v706
        %v888 = vunpack.c.h.b16 %v706
        %v889 = vunpack.c.l.b16 %v707
        %v890 = vunpack.c.h.b16 %v707
        %v891 = vunpack.c.l.b16 %v708
        %v892 = vunpack.c.h.b16 %v708
        %v893 = vunpack.c.l.b16 %v709
        %v894 = vunpack.c.h.b16 %v709
        %v895 = vunpack.c.l.b16 %v710
        %v896 = vunpack.c.h.b16 %v710
        %v897 = vunpack.c.l.b16 %v711
        %v898 = vunpack.c.h.b16 %v711
        %v899 = vunpack.c.l.b16 %v712
        %v900 = vunpack.c.h.b16 %v712
        %v901 = vunpack.c.l.b16 %v713
        %v902 = vunpack.c.h.b16 %v713
        %v903 = vunpack.c.l.b16 %v714
        %v904 = vunpack.c.h.b16 %v714
        %v905 = vunpack.c.l.b16 %v715
        %v906 = vunpack.c.h.b16 %v715
        %v907 = vunpack.c.l.b16 %v716
        %v908 = vunpack.c.h.b16 %v716
        %v909 = vunpack.c.l.b16 %v717
        %v910 = vunpack.c.h.b16 %v717
        %v911 = vunpack.c.l.b16 %v718
        %v912 = vunpack.c.h.b16 %v718
        %v913 = vunpack.c.l.b16 %v719
        %v914 = vunpack.c.h.b16 %v719
        %v915 = vunpack.c.l.b16 %v720
        %v916 = vunpack.c.h.b16 %v720
        %v917 = vunpack.c.l.b16 %v721
        %v918 = vunpack.c.h.b16 %v721
        %v919 = vunpack.c.l.b16 %v722
        %v920 = vunpack.c.h.b16 %v722
        %v921 = vunpack.c.l.b16 %v723
        %v922 = vunpack.c.h.b16 %v723
        %v923 = vunpack.c.l.b16 %v724
        %v924 = vunpack.c.h.b16 %v724
        %v925 = vunpack.c.l.b16 %v725
        %v926 = vunpack.c.h.b16 %v725
        %v927 = vunpack.c.l.b16 %v726
        %v928 = vunpack.c.h.b16 %v726
        %v929 = vunpack.c.l.b16 %v727
        %v930 = vunpack.c.h.b16 %v727
        %v931 = vunpack.c.l.b16 %v728
        %v932 = vunpack.c.h.b16 %v728
        %v933 = vunpack.c.l.b16 %v729
        %v934 = vunpack.c.h.b16 %v729
        %v935 = vunpack.c.l.b16 %v730
        %v936 = vunpack.c.h.b16 %v730
        %v937 = vunpack.c.l.b16 %v731
        %v938 = vunpack.c.h.b16 %v731
        %v939 = vunpack.c.l.b16 %v732
        %v940 = vunpack.c.h.b16 %v732
        %v941 = vunpack.c.l.b16 %v733
        %v942 = vunpack.c.h.b16 %v733
        %v943 = vunpack.c.l.b16 %v734
        %v944 = vunpack.c.h.b16 %v734
        %v945 = vunpack.c.l.b16 %v735
        %v946 = vunpack.c.h.b16 %v735
        %v947 = vunpack.c.l.b16 %v736
        %v948 = vunpack.c.h.b16 %v736
        %v949 = vunpack.c.l.b16 %v737
        %v950 = vunpack.c.h.b16 %v737
        %v951 = vunpack.c.l.b16 %v738
        %v952 = vunpack.c.h.b16 %v738
        %v953 = vpack.c.b16 %v829, %v825
        %v954 = vpack.c.b16 %v830, %v826
        %v955 = vpack.c.b16 %v831, %v827
        %v956 = vpack.c.b16 %v832, %v828
        %v957 = vpack.c.b16 %v837, %v833
        %v958 = vpack.c.b16 %v838, %v834
        %v959 = vpack.c.b16 %v839, %v835
        %v960 = vpack.c.b16 %v840, %v836
        %v961 = vpack.c.b16 %v845, %v841
        %v962 = vpack.c.b16 %v846, %v842
        %v963 = vpack.c.b16 %v847, %v843
        %v964 = vpack.c.b16 %v848, %v844
        %v965 = vpack.c.b16 %v853, %v849
        %v966 = vpack.c.b16 %v854, %v850
        %v967 = vpack.c.b16 %v855, %v851
        %v968 = vpack.c.b16 %v856, %v852
        %v969 = vpack.c.b16 %v861, %v857
        %v970 = vpack.c.b16 %v862, %v858
        %v971 = vpack.c.b16 %v863, %v859
        %v972 = vpack.c.b16 %v864, %v860
        %v973 = vpack.c.b16 %v869, %v865
        %v974 = vpack.c.b16 %v870, %v866
        %v975 = vpack.c.b16 %v871, %v867
        %v976 = vpack.c.b16 %v872, %v868
        %v977 = vpack.c.b16 %v877, %v873
        %v978 = vpack.c.b16 %v878, %v874
        %v979 = vpack.c.b16 %v879, %v875
        %v980 = vpack.c.b16 %v880, %v876
        %v981 = vpack.c.b16 %v885, %v881
        %v982 = vpack.c.b16 %v886, %v882
        %v983 = vpack.c.b16 %v887, %v883
        %v984 = vpack.c.b16 %v888, %v884
        %v985 = vpack.c.b16 %v893, %v889
        %v986 = vpack.c.b16 %v894, %v890
        %v987 = vpack.c.b16 %v895, %v891
        %v988 = vpack.c.b16 %v896, %v892
        %v989 = vpack.c.b16 %v901, %v897
        %v990 = vpack.c.b16 %v902, %v898
        %v991 = vpack.c.b16 %v903, %v899
        %v992 = vpack.c.b16 %v904, %v900
        %v993 = vpack.c.b16 %v909, %v905
        %v994 = vpack.c.b16 %v910, %v906
        %v995 = vpack.c.b16 %v911, %v907
        %v996 = vpack.c.b16 %v912, %v908
        %v997 = vpack.c.b16 %v917, %v913
        %v998 = vpack.c.b16 %v918, %v914
        %v999 = vpack.c.b16 %v919, %v915
        %v1000 = vpack.c.b16 %v920, %v916
        %v1001 = vpack.c.b16 %v925, %v921
        %v1002 = vpack.c.b16 %v926, %v922
        %v1003 = vpack.c.b16 %v927, %v923
        %v1004 = vpack.c.b16 %v928, %v924
        %v1005 = vpack.c.b16 %v933, %v929
        %v1006 = vpack.c.b16 %v934, %v930
        %v1007 = vpack.c.b16 %v935, %v931
        %v1008 = vpack.c.b16 %v936, %v932
        %v1009 = vpack.c.b16 %v941, %v937
        %v1010 = vpack.c.b16 %v942, %v938
        %v1011 = vpack.c.b16 %v943, %v939
        %v1012 = vpack.c.b16 %v944, %v940
        %v1013 = vpack.c.b16 %v949, %v945
        %v1014 = vpack.c.b16 %v950, %v946
        %v1015 = vpack.c.b16 %v951, %v947
        %v1016 = vpack.c.b16 %v952, %v948
        %1081 = vmatprep.subr.bf16.mxu0 %v954
        %1082 = vmatpush1.bf16.msra.mxu0 %v953
        %1083 = vmatprep.subr.bf16.mxu0 %v958
        %1084 = vmatpush1.bf16.msra.mxu0 %v957
        %1085 = vmatprep.subr.bf16.mxu0 %v962
        %1086 = vmatpush1.bf16.msra.mxu0 %v961
        %1087 = vmatprep.subr.bf16.mxu0 %v966
        %1088 = vmatpush1.bf16.msra.mxu0 %v965
        %1089 = vmatprep.subr.bf16.mxu0 %v970
        %1090 = vmatpush1.bf16.msra.mxu0 %v969
        %1091 = vmatprep.subr.bf16.mxu0 %v974
        %1092 = vmatpush1.bf16.msra.mxu0 %v973
        %1093 = vmatprep.subr.bf16.mxu0 %v978
        %1094 = vmatpush1.bf16.msra.mxu0 %v977
        %1095 = vmatprep.subr.bf16.mxu0 %v982
        %1096 = vmatpush1.bf16.msra.mxu0 %v981
        %1097 = vmatprep.subr.bf16.mxu0 %v986
        %1098 = vmatpush1.bf16.msra.mxu0 %v985
        %1099 = vmatprep.subr.bf16.mxu0 %v990
        %1100 = vmatpush1.bf16.msra.mxu0 %v989
        %1101 = vmatprep.subr.bf16.mxu0 %v994
        %1102 = vmatpush1.bf16.msra.mxu0 %v993
        %1103 = vmatprep.subr.bf16.mxu0 %v998
        %1104 = vmatpush1.bf16.msra.mxu0 %v997
        %1105 = vmatprep.subr.bf16.mxu0 %v1002
        %1106 = vmatpush1.bf16.msra.mxu0 %v1001
        %1107 = vmatprep.subr.bf16.mxu0 %v1006
        %1108 = vmatpush1.bf16.msra.mxu0 %v1005
        %1109 = vmatprep.subr.bf16.mxu0 %v1010
        %1110 = vmatpush1.bf16.msra.mxu0 %v1009
        %1111 = vmatprep.subr.bf16.mxu0 %v1014
        %1112 = vmatpush1.bf16.msra.mxu0 %v1013
        %1113 = vmatprep.mubr.bf16.mxu0 %v668
        %1114 = vmatmul.mubr.bf16.gmra.mrb[0].mxu0 %v667
        %v1115 = vpop.f32.mrb[0].mxu0
        %v1116 = vadd.f32 %v744, %v1115
        %v1117 = vpop.f32.mrb[0].mxu0
        %v1118 = vadd.f32 %v748, %v1117
        %v1119 = vpop.f32.mrb[0].mxu0
        %v1120 = vadd.f32 %v744, %v1119
        %v1121 = vpop.f32.mrb[0].mxu0
        %v1122 = vadd.f32 %v748, %v1121
        %1123 = vmatprep.mubr.bf16.mxu0 %v670
        %1124 = vmatmul.mubr.bf16.gmra.mrb[0].mxu0 %v669
        %v1125 = vpop.f32.mrb[0].mxu0
        %v1126 = vadd.f32 %v744, %v1125
        %v1127 = vpop.f32.mrb[0].mxu0
        %v1128 = vadd.f32 %v748, %v1127
        %v1129 = vpop.f32.mrb[0].mxu0
        %v1130 = vadd.f32 %v744, %v1129
        %v1131 = vpop.f32.mrb[0].mxu0
        %v1132 = vadd.f32 %v748, %v1131
        %1133 = vmatprep.mubr.bf16.mxu0 %v672
        %1134 = vmatmul.mubr.bf16.gmra.mrb[0].mxu0 %v671
        %v1135 = vpop.f32.mrb[0].mxu0
        %v1136 = vadd.f32 %v744, %v1135
        %v1137 = vpop.f32.mrb[0].mxu0
        %v1138 = vadd.f32 %v748, %v1137
        %v1139 = vpop.f32.mrb[0].mxu0
        %v1140 = vadd.f32 %v744, %v1139
        %v1141 = vpop.f32.mrb[0].mxu0
        %v1142 = vadd.f32 %v748, %v1141
        %1143 = vmatprep.mubr.bf16.mxu0 %v674
        %1144 = vmatmul.mubr.bf16.gmra.mrb[0].mxu0 %v673
        %v1145 = vpop.f32.mrb[0].mxu0
        %v1146 = vadd.f32 %v744, %v1145
        %v1147 = vpop.f32.mrb[0].mxu0
        %v1148 = vadd.f32 %v748, %v1147
        %v1149 = vpop.f32.mrb[0].mxu0
        %v1150 = vadd.f32 %v744, %v1149
        %v1151 = vpop.f32.mrb[0].mxu0
        %v1152 = vadd.f32 %v748, %v1151
        %1153 = vdwg.mxu0
        %1154 = vmatprep.subr.bf16.mxu0 %v956
        %1155 = vmatpush1.bf16.msra.mxu0 %v955
        %1156 = vmatprep.subr.bf16.mxu0 %v960
        %1157 = vmatpush1.bf16.msra.mxu0 %v959
        %1158 = vmatprep.subr.bf16.mxu0 %v964
        %1159 = vmatpush1.bf16.msra.mxu0 %v963
        %1160 = vmatprep.subr.bf16.mxu0 %v968
        %1161 = vmatpush1.bf16.msra.mxu0 %v967
        %1162 = vmatprep.subr.bf16.mxu0 %v972
        %1163 = vmatpush1.bf16.msra.mxu0 %v971
        %1164 = vmatprep.subr.bf16.mxu0 %v976
        %1165 = vmatpush1.bf16.msra.mxu0 %v975
        %1166 = vmatprep.subr.bf16.mxu0 %v980
        %1167 = vmatpush1.bf16.msra.mxu0 %v979
        %1168 = vmatprep.subr.bf16.mxu0 %v984
        %1169 = vmatpush1.bf16.msra.mxu0 %v983
        %1170 = vmatprep.subr.bf16.mxu0 %v988
        %1171 = vmatpush1.bf16.msra.mxu0 %v987
        %1172 = vmatprep.subr.bf16.mxu0 %v992
        %1173 = vmatpush1.bf16.msra.mxu0 %v991
        %1174 = vmatprep.subr.bf16.mxu0 %v996
        %1175 = vmatpush1.bf16.msra.mxu0 %v995
        %1176 = vmatprep.subr.bf16.mxu0 %v1000
        %1177 = vmatpush1.bf16.msra.mxu0 %v999
        %1178 = vmatprep.subr.bf16.mxu0 %v1004
        %1179 = vmatpush1.bf16.msra.mxu0 %v1003
        %1180 = vmatprep.subr.bf16.mxu0 %v1008
        %1181 = vmatpush1.bf16.msra.mxu0 %v1007
        %1182 = vmatprep.subr.bf16.mxu0 %v1012
        %1183 = vmatpush1.bf16.msra.mxu0 %v1011
        %1184 = vmatprep.subr.bf16.mxu0 %v1016
        %1185 = vmatpush1.bf16.msra.mxu0 %v1015
        %1186 = vmatprep.mubr.bf16.mxu0 %v668
        %1187 = vmatmul.mubr.bf16.gmra.mrb[0].mxu0 %v667
        %v1188 = vpop.f32.mrb[0].mxu0
        %v1189 = vadd.f32 %v752, %v1188
        %v1190 = vpop.f32.mrb[0].mxu0
        %v1191 = vadd.f32 %v756, %v1190
        %v1192 = vpop.f32.mrb[0].mxu0
        %v1193 = vadd.f32 %v752, %v1192
        %v1194 = vpop.f32.mrb[0].mxu0
        %v1195 = vadd.f32 %v756, %v1194
        %1196 = vmatprep.mubr.bf16.mxu0 %v670
        %1197 = vmatmul.mubr.bf16.gmra.mrb[0].mxu0 %v669
        %v1198 = vpop.f32.mrb[0].mxu0
        %v1199 = vadd.f32 %v752, %v1198
        %v1200 = vpop.f32.mrb[0].mxu0
        %v1201 = vadd.f32 %v756, %v1200
        %v1202 = vpop.f32.mrb[0].mxu0
        %v1203 = vadd.f32 %v752, %v1202
        %v1204 = vpop.f32.mrb[0].mxu0
        %v1205 = vadd.f32 %v756, %v1204
        %1206 = vmatprep.mubr.bf16.mxu0 %v672
        %1207 = vmatmul.mubr.bf16.gmra.mrb[0].mxu0 %v671
        %v1208 = vpop.f32.mrb[0].mxu0
        %v1209 = vadd.f32 %v752, %v1208
        %v1210 = vpop.f32.mrb[0].mxu0
        %v1211 = vadd.f32 %v756, %v1210
        %v1212 = vpop.f32.mrb[0].mxu0
        %v1213 = vadd.f32 %v752, %v1212
        %v1214 = vpop.f32.mrb[0].mxu0
        %v1215 = vadd.f32 %v756, %v1214
        %1216 = vmatprep.mubr.bf16.mxu0 %v674
        %1217 = vmatmul.mubr.bf16.gmra.mrb[0].mxu0 %v673
        %v1218 = vpop.f32.mrb[0].mxu0
        %v1219 = vadd.f32 %v752, %v1218
        %v1220 = vpop.f32.mrb[0].mxu0
        %v1221 = vadd.f32 %v756, %v1220
        %v1222 = vpop.f32.mrb[0].mxu0
        %v1223 = vadd.f32 %v752, %v1222
        %v1224 = vpop.f32.mrb[0].mxu0
        %v1225 = vadd.f32 %v756, %v1224
        %1226 = vdwg.mxu0
        %v1227 = vmul.f32 %v1116, %v501
        %v1228 = vmul.f32 %v1118, %v502
        %v1229 = vmul.f32 %v1120, %v503
        %v1230 = vmul.f32 %v1122, %v504
        %v1231 = vmul.f32 %v1126, %v505
        %v1232 = vmul.f32 %v1128, %v506
        %v1233 = vmul.f32 %v1130, %v507
        %v1234 = vmul.f32 %v1132, %v508
        %v1235 = vmul.f32 %v1136, %v509
        %v1236 = vmul.f32 %v1138, %v510
        %v1237 = vmul.f32 %v1140, %v511
        %v1238 = vmul.f32 %v1142, %v512
        %v1239 = vmul.f32 %v1146, %v513
        %v1240 = vmul.f32 %v1148, %v514
        %v1241 = vmul.f32 %v1150, %v515
        %v1242 = vmul.f32 %v1152, %v516
        %v1243 = vadd.f32 %v1227, %v1189
        %v1244 = vadd.f32 %v1228, %v1191
        %v1245 = vadd.f32 %v1229, %v1193
        %v1246 = vadd.f32 %v1230, %v1195
        %v1247 = vadd.f32 %v1231, %v1199
        %v1248 = vadd.f32 %v1232, %v1201
        %v1249 = vadd.f32 %v1233, %v1203
        %v1250 = vadd.f32 %v1234, %v1205
        %v1251 = vadd.f32 %v1235, %v1209
        %v1252 = vadd.f32 %v1236, %v1211
        %v1253 = vadd.f32 %v1237, %v1213
        %v1254 = vadd.f32 %v1238, %v1215
        %v1255 = vadd.f32 %v1239, %v1219
        %v1256 = vadd.f32 %v1240, %v1221
        %v1257 = vadd.f32 %v1241, %v1223
        %v1258 = vadd.f32 %v1242, %v1225
        %1259 = vst [vmem:[%s320] sm:$0xff] %v1243
        %1260 = vst [vmem:[%s320 + $0x8] sm:$0xff] %v1244
        %1261 = vst [vmem:[%s320 + $0x10] sm:$0xff] %v1245
        %1262 = vst [vmem:[%s320 + $0x18] sm:$0xff] %v1246
        %1263 = vst [vmem:[%s320 + $0x20] sm:$0xff] %v1247
        %1264 = vst [vmem:[%s320 + $0x28] sm:$0xff] %v1248
        %1265 = vst [vmem:[%s320 + $0x30] sm:$0xff] %v1249
        %1266 = vst [vmem:[%s320 + $0x38] sm:$0xff] %v1250
        %1267 = vst [vmem:[%s320 + $0x40] sm:$0xff] %v1251
        %1268 = vst [vmem:[%s320 + $0x48] sm:$0xff] %v1252
        %1269 = vst [vmem:[%s320 + $0x50] sm:$0xff] %v1253
        %1270 = vst [vmem:[%s320 + $0x58] sm:$0xff] %v1254
        %1271 = vst [vmem:[%s320 + $0x60] sm:$0xff] %v1255
        %1272 = vst [vmem:[%s320 + $0x68] sm:$0xff] %v1256
        %1273 = vst [vmem:[%s320 + $0x70] sm:$0xff] %v1257
        %1274 = vst [vmem:[%s320 + $0x78] sm:$0xff] %v1258
        %s1275 = sand.u32 %s168, 1
        %s1276 = scalar_lea.sflag [#allocation4], %s1275
        %s1277 = sand.u32 %s168, 1
        %s1278 = smul.addr %s1277, 128
        %s1279 = scalar_lea.vmem [#allocation7], %s1278
        // Predicated region
        $region53: #{tpu_custom_call.1} parent=43 // pred_check
          %p1280 = pneg %p178
        $region54: #{tpu_custom_call.1} parent=43 // pred_check_branch
          %1282 = sbr.rel (%p1280) target = $region56
        $region55: #{tpu_custom_call.1} parent=43 // pred_region
          %s1283 = smul.u32 8, %s24
          %s1284 = ssub.s32 25, %s1283
          %p1285 = scmp.lt.s32.totalorder %s1284, 8
          %s1286 = scalar_select %p1285, %s1284, 8
          %s1287 = smul.u32 128, %s1286
          %s1288 = smul.u32 %s1287, 2
          %s1290 = ssub.s32 2048, %s1288
          %1291 = vsyncadd %s1276, %s1290
          %p1292 = scmp.ne.s32.totalorder 0, %s1288
          %s1293 = smul.addr %s1283, 2
          %s1294 = smul.addr %s1293, 128
          %s1295 = scalar_lea.hbm %s6, %s1294
          %s1296 = smul.u32 16, %s1286
          %s1297 = sshll.u32 %s1279, 4
          %s1298 = int_to_ptr.vmem [resolvable:$true] %s1297
          %s1299 = sshll.u32 %s1296, 4
          %1303 = dma.vmem_to_hbm [thread:$0]  (%p1292), %s1298, %s1299, %s1295, %s1276, 256, 256, 16
        $region56: #{tpu_custom_call.1} parent=43 // pred_fallthru
          _
      $region44: #{tpu_custom_call.1} parent=5 // pred_fallthru
        _
      %p1304 = scmp.le.s32.totalorder 2, %s19
      // Predicated region
      $region57: #{tpu_custom_call.1} parent=5 // pred_check
        %p1305 = pneg %p1304
      $region58: #{tpu_custom_call.1} parent=5 // pred_check_branch
        %1307 = sbr.rel (%p1305) target = $region60
      $region59: #{tpu_custom_call.1} parent=5 // pred_region
        %s1308 = ssub.s32 %s19, 2
        // Predicated region
        $region61: #{tpu_custom_call.1} parent=59 // pred_check
          %p1309 = pneg %p184
        $region62: #{tpu_custom_call.1} parent=59 // pred_check_branch
          %1311 = sbr.rel (%p1309) target = $region64
        $region63: #{tpu_custom_call.1} parent=59 // pred_region
          %s1312 = sand.u32 %s169, 1
          %s1313 = scalar_lea.sflag [#allocation4], %s1312
          %s1314 = sand.u32 %s169, 1
          %s1315 = smul.addr %s1314, 128
          %s1316 = scalar_lea.vmem [#allocation7], %s1315
          %1317 = dma.done %s1313, 2048
        $region64: #{tpu_custom_call.1} parent=59 // pred_fallthru
          _
      $region60: #{tpu_custom_call.1} parent=5 // pred_fallthru
        _
    $region6: #{tpu_custom_call.1} parent=1 // loop_footer
      %s23 = sadd.s32 1, %s19
    $region7: #{tpu_custom_call.1} parent=1 // loop_footer_branch
      %18 = sbr.rel target = $region3
    $region8: #{tpu_custom_call.1} parent=1 // loop_exit
      _
    %1318 = vsyncpa [#allocation3], 1
    %s1319 = scalar_lea.sflag [#allocation3], 1
    %1320 = vsyncpa %s1319, 1
    %1321 = vsyncpa [#allocation6], 1
    %1322 = vsyncpa [#allocation4], 1
    %s1323 = scalar_lea.sflag [#allocation4], 1
    %1324 = vsyncpa %s1323, 1

</llo_original>
